<compile_context>
chip_gen: v7x
topology: tpu7x:2x2x1
jax: 0.10.0
libtpu: 0.0.40
codegen_flags: <defaults>
</compile_context>

<pallas_src>
import jax
import jax.numpy as jnp
from jax.experimental import pallas as pl
from jax.experimental.pallas import tpu as pltpu

LANES = 128


def _logistic_sigmoid_kernel(w_ref, x1_ref, x2_ref, o_ref):
    # Scalar reads from SMEM; dot product on the scalar ALU (6 FLOPs total).
    d = w_ref[0] + w_ref[1] * x1_ref[0] + w_ref[2] * x2_ref[0]
    # Sigmoid on one vreg: broadcast -d lane-dense, exp on the EUP,
    # then 1/(1+exp(-d)). Exact form keeps the 1e-6 self-test tolerance.
    z = jnp.full(o_ref.shape, -d, dtype=jnp.float32)
    o_ref[...] = 1.0 / (1.0 + jnp.exp(z))


@jax.jit
def logistic_sigmoid_forward(weights3, x1, x2):
    """weights3: (3,) f32; x1, x2: scalars. Returns scalar sigmoid output."""
    w = jnp.asarray(weights3, jnp.float32)
    x1v = jnp.asarray(x1, jnp.float32).reshape(1)
    x2v = jnp.asarray(x2, jnp.float32).reshape(1)

    out = pl.pallas_call(
        _logistic_sigmoid_kernel,
        out_shape=jax.ShapeDtypeStruct((1, LANES), jnp.float32),
        in_specs=[
            pl.BlockSpec(memory_space=pltpu.MemorySpace.SMEM),  # weights (3,)
            pl.BlockSpec(memory_space=pltpu.MemorySpace.SMEM),  # x1 (1,)
            pl.BlockSpec(memory_space=pltpu.MemorySpace.SMEM),  # x2 (1,)
        ],
        out_specs=pl.BlockSpec(memory_space=pltpu.MemorySpace.VMEM),
    )(w, x1v, x2v)

    return out[0, 0]


if __name__ == "__main__":
    # Deterministic parameter init matching the PyTorch __init__ defaults.
    w0, w1, w2 = -0.02, 0.06, -0.05
    weights = jnp.array([w0, w1, w2], dtype=jnp.float32)

    # Deterministic example inputs (two scalars x1, x2).
    key = jax.random.PRNGKey(0)
    k1, k2 = jax.random.split(key)
    x1 = jax.random.normal(k1, (), dtype=jnp.float32)
    x2 = jax.random.normal(k2, (), dtype=jnp.float32)

    h = logistic_sigmoid_forward(weights, x1, x2)
    h = jax.block_until_ready(h)

    # Pure-JAX reference check of the forward pass.
    inputs = jnp.stack([jnp.float32(1.0), x1, x2])
    d_ref = jnp.sum(weights * inputs)
    h_ref = 1.0 / (1.0 + jnp.exp(-d_ref))
    assert jnp.allclose(h, h_ref, atol=1e-6, rtol=1e-6), (h, h_ref)

    # TODO(synk): calculate_loss/backward/step (training loop) are outside
    # forward() and intentionally not implemented as Pallas kernels.

    print("KERNEL_OK")
</pallas_src>

<mosaic_0001>
module attributes {stable_mosaic.version = 11 : i64} {
  func.func @_logistic_sigmoid_kernel(%arg0: memref<3xf32, #tpu.memory_space<smem>>, %arg1: memref<1xf32, #tpu.memory_space<smem>>, %arg2: memref<1xf32, #tpu.memory_space<smem>>, %arg3: memref<1x128xf32, #tpu.memory_space<vmem>>) attributes {dimension_semantics = [], scalar_prefetch = 0 : i64, scratch_operands = 0 : i64, tpu.core_type = #tpu.core_type<tc>} {
    %c0 = arith.constant 0 : index
    %0 = memref.load %arg0[%c0] : memref<3xf32, #tpu.memory_space<smem>>
    %c1 = arith.constant 1 : index
    %1 = memref.load %arg0[%c1] : memref<3xf32, #tpu.memory_space<smem>>
    %c0_0 = arith.constant 0 : index
    %2 = memref.load %arg1[%c0_0] : memref<1xf32, #tpu.memory_space<smem>>
    %3 = arith.mulf %1, %2 : f32
    %4 = arith.addf %0, %3 : f32
    %c2 = arith.constant 2 : index
    %5 = memref.load %arg0[%c2] : memref<3xf32, #tpu.memory_space<smem>>
    %c0_1 = arith.constant 0 : index
    %6 = memref.load %arg2[%c0_1] : memref<1xf32, #tpu.memory_space<smem>>
    %7 = arith.mulf %5, %6 : f32
    %8 = arith.addf %4, %7 : f32
    %cst = arith.constant 0.000000e+00 : f32
    %9 = arith.subf %cst, %8 : f32
    %10 = vector.broadcast %9 : f32 to vector<1x128xf32>
    %11 = math.exp %10 : vector<1x128xf32>
    %cst_2 = arith.constant 1.000000e+00 : f32
    %12 = vector.broadcast %cst_2 : f32 to vector<1x128xf32>
    %13 = arith.addf %12, %11 : vector<1x128xf32>
    %cst_3 = arith.constant 1.000000e+00 : f32
    %14 = vector.broadcast %cst_3 : f32 to vector<1x128xf32>
    %15 = arith.divf %14, %13 : vector<1x128xf32>
    %c0_4 = arith.constant 0 : index
    %c0_5 = arith.constant 0 : index
    %16 = vector.load %arg3[%c0_4, %c0_5] : memref<1x128xf32, #tpu.memory_space<vmem>>, vector<1x128xf32>
    tpu.vector_store %arg3[%c0_4, %c0_5], %15 {strides = array<i32>} : memref<1x128xf32, #tpu.memory_space<vmem>>, vector<1x128xf32>,
    return
  }
}

</mosaic_0001>

<llo_original>
// kernel: logistic_sigmoid_forward.1
$region0: #{logistic_sigmoid_forward.1}
  #allocation0 [shape = 'u32[]', space=smem, size = 0x4, offset = 0x4, fixed_abs, tag = 'smem constant byte address 0x4 - core index']
  #allocation1 [shape = 'u32[144,128]{1,0:T(1,128)}', space=vmem, size = 0x12000, scoped, tag = 'internal scratch']
  #allocation2 [shape = 'f32[1]{0:T(128)S(6)}', space=smem, size = 0x200, scoped, tag = 'scoped memory for logistic_sigmoid_forward.1']
  #allocation3 [shape = 'f32[1]{0:T(128)S(6)}', space=smem, size = 0x200, scoped, tag = 'scoped memory for logistic_sigmoid_forward.1']
  %s0 = inlined_call_operand.vmem [shape: f32[3], index: 0, kind: input, shape index: {}]
  %s1 = inlined_call_operand.<no memory space> [shape: f32[1], index: 1, kind: input, shape index: {}]
  %s2 = inlined_call_operand.<no memory space> [shape: f32[1], index: 2, kind: input, shape index: {}]
  %s3 = inlined_call_operand.hbm [shape: f32[1,128], index: 3, kind: output, shape index: {}]
  %s4 = sld [smem:[#allocation0]]
  $region26: #{logistic_sigmoid_forward.1} parent=0
    _
  %s6 = ssub.s32 1, %s4
  %s7 = scalar_select 0, %s6, %s4
  %8 = sst [smem:[#allocation2]] %s1
  %9 = sst [smem:[#allocation3]] %s2
  $region1: #{logistic_sigmoid_forward.1} parent=0
    #allocation4 [shape = 'u8[512]{0}', space=smem, size = 0x200, scoped, tag = 'input window, operand 0, single buffered']
    #allocation5 [shape = 's32[1]{0}', space=sflag, size = 0x4, scoped, tag = 'scoped memory for logistic_sigmoid_forward.1']
    #allocation6 [shape = 's32[1]{0}', space=sflag, size = 0x4, scoped, tag = 'scoped memory for logistic_sigmoid_forward.1']
    #allocation7 [shape = 'u8[512]{0}', space=vmem, size = 0x400, scoped, tag = 'output window, operand 0, single buffered']
    %10 = vsyncpa [#allocation6], 0
    %11 = vsyncpa [#allocation5], 0
    // Predicated region
    $region2: #{logistic_sigmoid_forward.1} parent=1 // pred_check
      _
    $region3: #{logistic_sigmoid_forward.1} parent=1 // pred_check_branch
      %13 = sbr.rel (0) target = $region5
    $region4: #{logistic_sigmoid_forward.1} parent=1 // pred_region
      %s15 = ssub.s32 16, 16
      %16 = vsyncadd [#allocation6], %s15
      %s18 = sshll.u32 %s0, 4
      %s19 = int_to_ptr.vmem [resolvable:$true] %s18
      %21 = dma.vmem_to_smem %s19, 16, [#allocation4], [#allocation6]
    $region5: #{logistic_sigmoid_forward.1} parent=1 // pred_fallthru
      _
    // Predicated region
    $region6: #{logistic_sigmoid_forward.1} parent=1 // pred_check
      _
    $region7: #{logistic_sigmoid_forward.1} parent=1 // pred_check_branch
      %23 = sbr.rel (0) target = $region9
    $region8: #{logistic_sigmoid_forward.1} parent=1 // pred_region
      _
    $region9: #{logistic_sigmoid_forward.1} parent=1 // pred_fallthru
      _
    // Predicated region
    $region10: #{logistic_sigmoid_forward.1} parent=1 // pred_check
      _
    $region11: #{logistic_sigmoid_forward.1} parent=1 // pred_check_branch
      %25 = sbr.rel (0) target = $region13
    $region12: #{logistic_sigmoid_forward.1} parent=1 // pred_region
      _
    $region13: #{logistic_sigmoid_forward.1} parent=1 // pred_fallthru
      _
    // Predicated region
    $region14: #{logistic_sigmoid_forward.1} parent=1 // pred_check
      _
    $region15: #{logistic_sigmoid_forward.1} parent=1 // pred_check_branch
      %27 = sbr.rel (0) target = $region17
    $region16: #{logistic_sigmoid_forward.1} parent=1 // pred_region
      %28 = dma.done [#allocation6], 16
    $region17: #{logistic_sigmoid_forward.1} parent=1 // pred_fallthru
      _
    %29 = sfence
    %s30 = sld [smem:[#allocation4]]
    %s31 = sld [smem:[#allocation4 + $0x1]]
    %s32 = sld [smem:[#allocation2]]
    %s33 = smul.f32 %s31, %s32
    %s34 = sadd.f32 %s30, %s33
    %s35 = sld [smem:[#allocation4 + $0x2]]
    %s36 = sld [smem:[#allocation3]]
    %s37 = smul.f32 %s35, %s36
    %s38 = sadd.f32 %s34, %s37
    %s39 = ssub.f32 0.0, %s38
    %v40 = vstv %s39
    %v41 = vmul.f32 %v40, 1.442695
    %v42 = vpow.pop %v41
    %v43 = vadd.f32 %v42, 1.0
    %v44 = vrcp.pop %v43
    %v45 = vmul.f32 1.0, %v44
    %46 = vst [vmem:[#allocation7] sm:$0x1] %v45
    // Predicated region
    $region18: #{logistic_sigmoid_forward.1} parent=1 // pred_check
      _
    $region19: #{logistic_sigmoid_forward.1} parent=1 // pred_check_branch
      %48 = sbr.rel (0) target = $region21
    $region20: #{logistic_sigmoid_forward.1} parent=1 // pred_region
      %s50 = ssub.s32 16, 16
      %51 = vsyncadd [#allocation5], %s50
      %s53 = sshll.u32 [#allocation7], 4
      %s54 = int_to_ptr.vmem [resolvable:$true] %s53
      %56 = dma.vmem_to_hbm [thread:$0]  %s54, 16, %s3, [#allocation5]
    $region21: #{logistic_sigmoid_forward.1} parent=1 // pred_fallthru
      _
    // Predicated region
    $region22: #{logistic_sigmoid_forward.1} parent=1 // pred_check
      _
    $region23: #{logistic_sigmoid_forward.1} parent=1 // pred_check_branch
      %58 = sbr.rel (0) target = $region25
    $region24: #{logistic_sigmoid_forward.1} parent=1 // pred_region
      %59 = dma.done [#allocation5], 16
    $region25: #{logistic_sigmoid_forward.1} parent=1 // pred_fallthru
      _
    %60 = vsyncpa [#allocation5], 1
    %61 = vsyncpa [#allocation6], 1

</llo_original>
